<compile_context>
chip_gen: v5e
topology: v5e:2x2
jax: 0.10.0
libtpu: 0.0.40
codegen_flags: <defaults>
</compile_context>

<pallas_src>
import functools

import jax
import jax.numpy as jnp
from jax.experimental import pallas as pl
from jax.experimental.pallas import tpu as pltpu


def _value_robobobo_kernel(s0_ref, xseq_ref, wd_ref, ws_ref, wh_ref, aux_ref,
                           out_ref, *, num_layers):
    """One batch tile of the fused forward pass. Weights/biases stay VMEM-resident."""
    # Layer 0. The linear policy sub-network is already folded into ws / aux[0]
    # at parameter-prep time (exact algebraic fusion), so this is two accumulating
    # MXU matmuls over the two activation streams instead of a concat + one matmul.
    h = jnp.dot(s0_ref[...], wd_ref[...], preferred_element_type=jnp.float32)
    h = h + jnp.dot(xseq_ref[...], ws_ref[...], preferred_element_type=jnp.float32)
    h = h + aux_ref[0]
    # TODO(synk): nn.Dropout layers are identity here (eval-mode semantics).

    # Hidden layers: Linear -> ReLU. MXU inputs in activation dtype, f32 accumulate.
    for i in range(num_layers):
        h = jnp.dot(h.astype(wh_ref.dtype), wh_ref[i],
                    preferred_element_type=jnp.float32) + aux_ref[i + 1]
        h = jnp.maximum(h, 0.0)

    # Output head Linear(H, 1), emitted directly as a lane-dense (1, TILE_B) row:
    # contract the H axis of both operands (q @ k^T pattern) so no 128-wide
    # broadcast slab and no padded column store are needed. MXU is idle here.
    wout_row = aux_ref[num_layers + 1]                       # (1, H) f32
    val = jax.lax.dot_general(wout_row, h, (((1,), (1,)), ((), ())),
                              preferred_element_type=jnp.float32)  # (1, TILE_B)
    bout = aux_ref[num_layers + 2][:, :1]                    # (1, 1) f32
    out_ref[...] = val + bout


def value_robobobo_forward(s0, s_seq, params, *, num_layers,
                           activation_dtype=jnp.bfloat16):
    """s0: (B, d0) direct state features; s_seq: (B, seq_len, input_dim)."""
    B, d0 = s0.shape
    seq_len, input_dim = s_seq.shape[1], s_seq.shape[2]
    D_sub = seq_len * input_dim
    H = params["w0"].shape[1]
    L = num_layers

    # --- algebraic fold of the (linear) policy sub-network into layer 0 ---
    w0 = params["w0"]                                   # (d0 + sub_hidden, H)
    w0_direct, w0_sub = w0[:d0], w0[d0:]
    w_direct = w0_direct.astype(activation_dtype)                    # (d0, H)
    w_seq = (params["wsub"] @ w0_sub).astype(activation_dtype)       # (D_sub, H)
    wh = params["wh"].astype(activation_dtype)                       # (L, H, H)
    b0_fused = params["b0"] + params["bsub"] @ w0_sub                # (1, H)
    # Stack biases + output row + output bias into one small f32 operand.
    aux = jnp.concatenate(
        [b0_fused[None],                                             # (1, 1, H)
         params["bh"],                                               # (L, 1, H)
         params["wout"].T[None],                                     # (1, 1, H)
         jnp.broadcast_to(params["bout"].reshape(1, 1, 1), (1, 1, H))],
        axis=0).astype(jnp.float32)                                  # (L+3, 1, H)

    # --- batch tiling: lane-dense (1, B_pad) output row; TILE_B divides B_pad ---
    B_pad = 128 * pl.cdiv(B, 128)        # <=127 padded zero rows, never a full tile
    n_chunks = B_pad // 128
    divisors = [d for d in range(1, min(8, n_chunks) + 1) if n_chunks % d == 0]
    tile_chunks = max(divisors)          # tile cap = 1024 rows
    if n_chunks // tile_chunks < 2:      # prefer >=2 grid steps (v7x has 2 TCs)
        two_step = [d for d in divisors if n_chunks // d >= 2]
        if two_step:
            tile_chunks = max(two_step)
    TILE_B = 128 * tile_chunks
    grid = (n_chunks // tile_chunks,)

    x_direct = s0.astype(activation_dtype)
    x_seq = s_seq.reshape(B, D_sub).astype(activation_dtype)   # free, contiguous
    if B_pad != B:
        pad = ((0, B_pad - B), (0, 0))
        x_direct = jnp.pad(x_direct, pad)
        x_seq = jnp.pad(x_seq, pad)

    kernel = functools.partial(_value_robobobo_kernel, num_layers=L)

    in_specs = [
        pl.BlockSpec((TILE_B, d0), lambda i: (i, 0)),         # s0 stream (pipelined)
        pl.BlockSpec((TILE_B, D_sub), lambda i: (i, 0)),      # flattened s_seq stream
        pl.BlockSpec((d0, H), lambda i: (0, 0)),              # layer-0 weight (direct)
        pl.BlockSpec((D_sub, H), lambda i: (0, 0)),           # fused sub-net weight
        pl.BlockSpec((L, H, H), lambda i: (0, 0, 0)),         # hidden weights
        pl.BlockSpec((L + 3, 1, H), lambda i: (0, 0, 0)),     # biases + wout + bout
    ]
    out_specs = pl.BlockSpec((1, TILE_B), lambda i: (0, i))
    out_shape = jax.ShapeDtypeStruct((1, B_pad), jnp.float32)

    # Advisory cost estimate for XLA scheduling.
    bytes_act = jnp.dtype(activation_dtype).itemsize
    flops = 2 * B_pad * ((d0 + D_sub) * H + L * H * H + H)
    bytes_accessed = int(B_pad * (d0 + D_sub) * bytes_act
                         + (w_direct.size + w_seq.size + wh.size) * bytes_act
                         + aux.size * 4 + B_pad * 4)
    cost = pl.CostEstimate(flops=int(flops), transcendentals=0,
                           bytes_accessed=bytes_accessed)

    # VMEM budget: lane/sublane-padded block bytes x 2 (double buffering) plus
    # headroom for in-kernel f32 activations; tiny vs v7x's 32 MiB scoped default.
    rup = lambda x, m: ((x + m - 1) // m) * m
    blk_bytes = (
        2 * TILE_B * rup(d0, 128) * bytes_act
        + 2 * TILE_B * rup(D_sub, 128) * bytes_act
        + 2 * (rup(d0, 16) + rup(D_sub, 16) + L * rup(H, 16)) * rup(H, 128) * bytes_act
        + 2 * (L + 3) * 8 * rup(H, 128) * 4
        + 2 * 8 * TILE_B * 4
        + 2 * TILE_B * rup(H, 128) * 4)
    vmem_limit = int(min(32 * 2**20, max(4 * 2**20, 2 * blk_bytes)))

    out_row = pl.pallas_call(
        kernel,
        out_shape=out_shape,
        grid=grid,
        in_specs=in_specs,
        out_specs=out_specs,
        compiler_params=pltpu.CompilerParams(
            dimension_semantics=("parallel",),
            vmem_limit_bytes=vmem_limit),
        cost_estimate=cost,
    )(x_direct, x_seq, w_direct, w_seq, wh, aux)

    return out_row[0, :B][:, None]                            # (B, 1)


def _reference_forward(s0, s_seq, params, *, num_layers):
    """Pure-JAX f32 reference mirroring the PyTorch forward (dropout = identity)."""
    B = s0.shape[0]
    sub = s_seq.reshape(B, -1) @ params["wsub"] + params["bsub"]
    x = jnp.concatenate([s0, sub], axis=1)
    h = x @ params["w0"] + params["b0"]
    for i in range(num_layers):
        h = jnp.maximum(h @ params["wh"][i] + params["bh"][i], 0.0)
    return h @ params["wout"] + params["bout"]


def init_params(key, *, d0, seq_len, input_dim, sub_hidden, hidden_size,
                num_layers, init_w=0.003):
    """Deterministic uniform(-init_w, init_w) init, matching the module."""
    ks = jax.random.split(key, 8)
    u = lambda k, shape: jax.random.uniform(k, shape, jnp.float32,
                                            minval=-init_w, maxval=init_w)
    state_dim = d0 + sub_hidden  # num_inputs_policy_network
    return {
        # synthetic policy sub-network (flatten + linear)
        "wsub": u(ks[0], (seq_len * input_dim, sub_hidden)),
        "bsub": u(ks[1], (1, sub_hidden)),
        # ValueNetwork MLP
        "w0":   u(ks[2], (state_dim, hidden_size)),
        "b0":   u(ks[3], (1, hidden_size)),
        "wh":   u(ks[4], (num_layers, hidden_size, hidden_size)),
        "bh":   u(ks[5], (num_layers, 1, hidden_size)),
        "wout": u(ks[6], (hidden_size, 1)),
        "bout": u(ks[7], (1, 1)),
    }


if __name__ == "__main__":
    # Small shapes consistent with the module.
    B = 2
    d0 = 24            # direct (non-sub-network) state features
    seq_len = 8        # sub-network sequence length
    input_dim = 4      # sub-network per-step input dim
    sub_hidden = 8     # sub-network output dim
    hidden_size = 32
    num_layers = 3     # ValueRoboboboNetwork default

    key = jax.random.PRNGKey(0)
    k_s0, k_seq, k_params = jax.random.split(key, 3)

    s0 = jax.random.normal(k_s0, (B, d0), jnp.float32)
    s_seq = jax.random.normal(k_seq, (B, seq_len, input_dim), jnp.float32)

    params = init_params(k_params, d0=d0, seq_len=seq_len, input_dim=input_dim,
                         sub_hidden=sub_hidden, hidden_size=hidden_size,
                         num_layers=num_layers)

    ref = _reference_forward(s0, s_seq, params, num_layers=num_layers)

    # Default (bf16 activation/weight stream, f32 accumulate) path.
    out = value_robobobo_forward(s0, s_seq, params, num_layers=num_layers)
    out = jax.block_until_ready(out)
    assert out.shape == (B, 1)
    assert jnp.allclose(out, ref, atol=5e-4, rtol=2e-2)   # bf16 mixed-precision tol

    # Full-f32 path matches the reference tightly (exact eval-mode semantics).
    out_f32 = value_robobobo_forward(s0, s_seq, params, num_layers=num_layers,
                                     activation_dtype=jnp.float32)
    out_f32 = jax.block_until_ready(out_f32)
    assert jnp.allclose(out_f32, ref, atol=1e-5, rtol=1e-5)

    print("KERNEL_OK")
</pallas_src>

<mosaic_0001>
module attributes {stable_mosaic.version = 11 : i64} {
  func.func @_value_robobobo_kernel(%arg0: i32, %arg1: memref<128x24xbf16, #tpu.memory_space<vmem>>, %arg2: memref<128x32xbf16, #tpu.memory_space<vmem>>, %arg3: memref<24x32xbf16, #tpu.memory_space<vmem>>, %arg4: memref<32x32xbf16, #tpu.memory_space<vmem>>, %arg5: memref<3x32x32xbf16, #tpu.memory_space<vmem>>, %arg6: memref<6x1x32xf32, #tpu.memory_space<vmem>>, %arg7: memref<1x128xf32, #tpu.memory_space<vmem>>) attributes {dimension_semantics = [#tpu.dimension_semantics<parallel>], iteration_bounds = array<i64: 1>, scalar_prefetch = 0 : i64, scratch_operands = 0 : i64, tpu.core_type = #tpu.core_type<tc>, window_params = [{transform_indices = @transform_0, window_bounds = array<i64: 128, 24>}, {transform_indices = @transform_1, window_bounds = array<i64: 128, 32>}, {pipeline_mode = #tpu.pipeline_mode<synchronous>, transform_indices = @transform_2, window_bounds = array<i64: 24, 32>}, {pipeline_mode = #tpu.pipeline_mode<synchronous>, transform_indices = @transform_3, window_bounds = array<i64: 32, 32>}, {pipeline_mode = #tpu.pipeline_mode<synchronous>, transform_indices = @transform_4, window_bounds = array<i64: 3, 32, 32>}, {pipeline_mode = #tpu.pipeline_mode<synchronous>, transform_indices = @transform_5, window_bounds = array<i64: 6, 1, 32>}, {transform_indices = @transform_6, window_bounds = array<i64: 1, 128>}]} {
    %c0 = arith.constant 0 : index
    %c0_0 = arith.constant 0 : index
    %0 = vector.load %arg1[%c0, %c0_0] : memref<128x24xbf16, #tpu.memory_space<vmem>>, vector<128x24xbf16>
    %c0_1 = arith.constant 0 : index
    %c0_2 = arith.constant 0 : index
    %1 = vector.load %arg3[%c0_1, %c0_2] : memref<24x32xbf16, #tpu.memory_space<vmem>>, vector<24x32xbf16>
    %cst = arith.constant dense<0.000000e+00> : vector<128x32xf32>
    %2 = tpu.matmul %0, %1, %cst {dimension_numbers = #tpu.dot_dimension_numbers<[1], [0], [0], [1], [0, 0, 1, 1], [], []>} : vector<128x24xbf16>, vector<24x32xbf16>, vector<128x32xf32> -> vector<128x32xf32>
    %c0_3 = arith.constant 0 : index
    %c0_4 = arith.constant 0 : index
    %3 = vector.load %arg2[%c0_3, %c0_4] : memref<128x32xbf16, #tpu.memory_space<vmem>>, vector<128x32xbf16>
    %c0_5 = arith.constant 0 : index
    %c0_6 = arith.constant 0 : index
    %4 = vector.load %arg4[%c0_5, %c0_6] : memref<32x32xbf16, #tpu.memory_space<vmem>>, vector<32x32xbf16>
    %cst_7 = arith.constant dense<0.000000e+00> : vector<128x32xf32>
    %5 = tpu.matmul %3, %4, %cst_7 {dimension_numbers = #tpu.dot_dimension_numbers<[1], [0], [0], [1], [0, 0, 1, 1], [], []>} : vector<128x32xbf16>, vector<32x32xbf16>, vector<128x32xf32> -> vector<128x32xf32>
    %6 = arith.addf %2, %5 : vector<128x32xf32>
    %c0_8 = arith.constant 0 : index
    %c0_9 = arith.constant 0 : index
    %c0_10 = arith.constant 0 : index
    %7 = vector.load %arg6[%c0_8, %c0_9, %c0_10] : memref<6x1x32xf32, #tpu.memory_space<vmem>>, vector<1x1x32xf32>
    %8 = vector.shape_cast %7 : vector<1x1x32xf32> to vector<1x32xf32>
    %9 = vector.broadcast %8 : vector<1x32xf32> to vector<128x32xf32>
    %10 = arith.addf %6, %9 : vector<128x32xf32>
    %11 = arith.truncf %10 : vector<128x32xf32> to vector<128x32xbf16>
    %c0_11 = arith.constant 0 : index
    %c0_12 = arith.constant 0 : index
    %c0_13 = arith.constant 0 : index
    %12 = vector.load %arg5[%c0_11, %c0_12, %c0_13] : memref<3x32x32xbf16, #tpu.memory_space<vmem>>, vector<1x32x32xbf16>
    %13 = vector.shape_cast %12 : vector<1x32x32xbf16> to vector<32x32xbf16>
    %cst_14 = arith.constant dense<0.000000e+00> : vector<128x32xf32>
    %14 = tpu.matmul %11, %13, %cst_14 {dimension_numbers = #tpu.dot_dimension_numbers<[1], [0], [0], [1], [0, 0, 1, 1], [], []>} : vector<128x32xbf16>, vector<32x32xbf16>, vector<128x32xf32> -> vector<128x32xf32>
    %c1 = arith.constant 1 : index
    %c0_15 = arith.constant 0 : index
    %c0_16 = arith.constant 0 : index
    %15 = vector.load %arg6[%c1, %c0_15, %c0_16] : memref<6x1x32xf32, #tpu.memory_space<vmem>>, vector<1x1x32xf32>
    %16 = vector.shape_cast %15 : vector<1x1x32xf32> to vector<1x32xf32>
    %17 = vector.broadcast %16 : vector<1x32xf32> to vector<128x32xf32>
    %18 = arith.addf %14, %17 : vector<128x32xf32>
    %cst_17 = arith.constant 0.000000e+00 : f32
    %19 = vector.broadcast %cst_17 : f32 to vector<128x32xf32>
    %20 = arith.maximumf %18, %19 : vector<128x32xf32>
    %21 = arith.truncf %20 : vector<128x32xf32> to vector<128x32xbf16>
    %c1_18 = arith.constant 1 : index
    %c0_19 = arith.constant 0 : index
    %c0_20 = arith.constant 0 : index
    %22 = vector.load %arg5[%c1_18, %c0_19, %c0_20] : memref<3x32x32xbf16, #tpu.memory_space<vmem>>, vector<1x32x32xbf16>
    %23 = vector.shape_cast %22 : vector<1x32x32xbf16> to vector<32x32xbf16>
    %cst_21 = arith.constant dense<0.000000e+00> : vector<128x32xf32>
    %24 = tpu.matmul %21, %23, %cst_21 {dimension_numbers = #tpu.dot_dimension_numbers<[1], [0], [0], [1], [0, 0, 1, 1], [], []>} : vector<128x32xbf16>, vector<32x32xbf16>, vector<128x32xf32> -> vector<128x32xf32>
    %c2 = arith.constant 2 : index
    %c0_22 = arith.constant 0 : index
    %c0_23 = arith.constant 0 : index
    %25 = vector.load %arg6[%c2, %c0_22, %c0_23] : memref<6x1x32xf32, #tpu.memory_space<vmem>>, vector<1x1x32xf32>
    %26 = vector.shape_cast %25 : vector<1x1x32xf32> to vector<1x32xf32>
    %27 = vector.broadcast %26 : vector<1x32xf32> to vector<128x32xf32>
    %28 = arith.addf %24, %27 : vector<128x32xf32>
    %cst_24 = arith.constant 0.000000e+00 : f32
    %29 = vector.broadcast %cst_24 : f32 to vector<128x32xf32>
    %30 = arith.maximumf %28, %29 : vector<128x32xf32>
    %31 = arith.truncf %30 : vector<128x32xf32> to vector<128x32xbf16>
    %c2_25 = arith.constant 2 : index
    %c0_26 = arith.constant 0 : index
    %c0_27 = arith.constant 0 : index
    %32 = vector.load %arg5[%c2_25, %c0_26, %c0_27] : memref<3x32x32xbf16, #tpu.memory_space<vmem>>, vector<1x32x32xbf16>
    %33 = vector.shape_cast %32 : vector<1x32x32xbf16> to vector<32x32xbf16>
    %cst_28 = arith.constant dense<0.000000e+00> : vector<128x32xf32>
    %34 = tpu.matmul %31, %33, %cst_28 {dimension_numbers = #tpu.dot_dimension_numbers<[1], [0], [0], [1], [0, 0, 1, 1], [], []>} : vector<128x32xbf16>, vector<32x32xbf16>, vector<128x32xf32> -> vector<128x32xf32>
    %c3 = arith.constant 3 : index
    %c0_29 = arith.constant 0 : index
    %c0_30 = arith.constant 0 : index
    %35 = vector.load %arg6[%c3, %c0_29, %c0_30] : memref<6x1x32xf32, #tpu.memory_space<vmem>>, vector<1x1x32xf32>
    %36 = vector.shape_cast %35 : vector<1x1x32xf32> to vector<1x32xf32>
    %37 = vector.broadcast %36 : vector<1x32xf32> to vector<128x32xf32>
    %38 = arith.addf %34, %37 : vector<128x32xf32>
    %cst_31 = arith.constant 0.000000e+00 : f32
    %39 = vector.broadcast %cst_31 : f32 to vector<128x32xf32>
    %40 = arith.maximumf %38, %39 : vector<128x32xf32>
    %c4 = arith.constant 4 : index
    %c0_32 = arith.constant 0 : index
    %c0_33 = arith.constant 0 : index
    %41 = vector.load %arg6[%c4, %c0_32, %c0_33] : memref<6x1x32xf32, #tpu.memory_space<vmem>>, vector<1x1x32xf32>
    %42 = vector.shape_cast %41 : vector<1x1x32xf32> to vector<1x32xf32>
    %cst_34 = arith.constant dense<0.000000e+00> : vector<1x128xf32>
    %43 = tpu.matmul %42, %40, %cst_34 {dimension_numbers = #tpu.dot_dimension_numbers<[1], [1], [0], [0], [0, 0, 1, 0], [], []>} : vector<1x32xf32>, vector<128x32xf32>, vector<1x128xf32> -> vector<1x128xf32>
    %c5 = arith.constant 5 : index
    %c0_35 = arith.constant 0 : index
    %c0_36 = arith.constant 0 : index
    %44 = vector.load %arg6[%c5, %c0_35, %c0_36] : memref<6x1x32xf32, #tpu.memory_space<vmem>>, vector<1x1x32xf32>
    %45 = vector.shape_cast %44 : vector<1x1x32xf32> to vector<1x32xf32>
    %46 = vector.extract_strided_slice %45 {offsets = [0, 0], sizes = [1, 1], strides = [1, 1]} : vector<1x32xf32> to vector<1x1xf32>
    %47 = vector.broadcast %46 : vector<1x1xf32> to vector<1x128xf32>
    %48 = arith.addf %43, %47 : vector<1x128xf32>
    %c0_37 = arith.constant 0 : index
    %c0_38 = arith.constant 0 : index
    %49 = vector.load %arg7[%c0_37, %c0_38] : memref<1x128xf32, #tpu.memory_space<vmem>>, vector<1x128xf32>
    tpu.vector_store %arg7[%c0_37, %c0_38], %48 {strides = array<i32>} : memref<1x128xf32, #tpu.memory_space<vmem>>, vector<1x128xf32>,
    return
  }
  func.func @transform_0(%arg0: i32) -> (i32, i32) {
    %c0_i32 = arith.constant 0 : i32
    %c0_i32_0 = arith.constant 0 : i32
    return %arg0, %c0_i32 : i32, i32
  }
  func.func @transform_1(%arg0: i32) -> (i32, i32) {
    %c0_i32 = arith.constant 0 : i32
    %c0_i32_0 = arith.constant 0 : i32
    return %arg0, %c0_i32 : i32, i32
  }
  func.func @transform_2(%arg0: i32) -> (i32, i32) {
    %c0_i32 = arith.constant 0 : i32
    %c0_i32_0 = arith.constant 0 : i32
    %c0_i32_1 = arith.constant 0 : i32
    return %c0_i32, %c0_i32_0 : i32, i32
  }
  func.func @transform_3(%arg0: i32) -> (i32, i32) {
    %c0_i32 = arith.constant 0 : i32
    %c0_i32_0 = arith.constant 0 : i32
    %c0_i32_1 = arith.constant 0 : i32
    return %c0_i32, %c0_i32_0 : i32, i32
  }
  func.func @transform_4(%arg0: i32) -> (i32, i32, i32) {
    %c0_i32 = arith.constant 0 : i32
    %c0_i32_0 = arith.constant 0 : i32
    %c0_i32_1 = arith.constant 0 : i32
    %c0_i32_2 = arith.constant 0 : i32
    return %c0_i32, %c0_i32_0, %c0_i32_1 : i32, i32, i32
  }
  func.func @transform_5(%arg0: i32) -> (i32, i32, i32) {
    %c0_i32 = arith.constant 0 : i32
    %c0_i32_0 = arith.constant 0 : i32
    %c0_i32_1 = arith.constant 0 : i32
    %c0_i32_2 = arith.constant 0 : i32
    return %c0_i32, %c0_i32_0, %c0_i32_1 : i32, i32, i32
  }
  func.func @transform_6(%arg0: i32) -> (i32, i32) {
    %c0_i32 = arith.constant 0 : i32
    %c0_i32_0 = arith.constant 0 : i32
    return %c0_i32, %arg0 : i32, i32
  }
}

</mosaic_0001>

<llo_original>
// kernel: tpu_custom_call.1
$region0: #{tpu_custom_call.1}
  #allocation0 [shape = 'u32[]', space=smem, size = 0x4, offset = 0x4, fixed_abs, tag = 'smem constant byte address 0x4 - core index']
  #allocation1 [shape = 'u32[72,128]{1,0:T(1,128)}', space=vmem, size = 0x9000, scoped, tag = 'internal scratch']
  %s0 = inlined_call_operand.vmem [shape: bf16[128,24], index: 0, kind: input, shape index: {}]
  %s1 = inlined_call_operand.vmem [shape: bf16[128,32], index: 1, kind: input, shape index: {}]
  %s2 = inlined_call_operand.vmem [shape: bf16[24,32], index: 2, kind: input, shape index: {}]
  %s3 = inlined_call_operand.vmem [shape: bf16[32,32], index: 3, kind: input, shape index: {}]
  %s4 = inlined_call_operand.vmem [shape: bf16[3,32,32], index: 4, kind: input, shape index: {}]
  %s5 = inlined_call_operand.vmem [shape: f32[6,1,32], index: 5, kind: input, shape index: {}]
  %s6 = inlined_call_operand.hbm [shape: f32[1,128], index: 6, kind: output, shape index: {}]
  %s7 = sld [smem:[#allocation0]]
  $region34: #{tpu_custom_call.1} parent=0
    _
  %s9 = ssub.s32 1, %s7
  %s10 = scalar_select 0, %s9, %s7
  $region1: #{tpu_custom_call.1} parent=0
    #allocation2 [shape = 'u8[512]{0}', space=vmem, size = 0x400, scoped, tag = 'output window, operand 0, single buffered']
    #allocation3 [shape = 's32[1]{0}', space=sflag, size = 0x4, scoped, tag = 'scoped memory for tpu_custom_call.1']
    %11 = vsyncpa [#allocation3], 0
    // Predicated region
    $region2: #{tpu_custom_call.1} parent=1 // pred_check
      _
    $region3: #{tpu_custom_call.1} parent=1 // pred_check_branch
      %13 = sbr.rel (0) target = $region5
    $region4: #{tpu_custom_call.1} parent=1 // pred_region
      _
    $region5: #{tpu_custom_call.1} parent=1 // pred_fallthru
      _
    // Predicated region
    $region6: #{tpu_custom_call.1} parent=1 // pred_check
      _
    $region7: #{tpu_custom_call.1} parent=1 // pred_check_branch
      %15 = sbr.rel (0) target = $region9
    $region8: #{tpu_custom_call.1} parent=1 // pred_region
      _
    $region9: #{tpu_custom_call.1} parent=1 // pred_fallthru
      _
    // Predicated region
    $region10: #{tpu_custom_call.1} parent=1 // pred_check
      _
    $region11: #{tpu_custom_call.1} parent=1 // pred_check_branch
      %17 = sbr.rel (0) target = $region13
    $region12: #{tpu_custom_call.1} parent=1 // pred_region
      _
    $region13: #{tpu_custom_call.1} parent=1 // pred_fallthru
      _
    // Predicated region
    $region14: #{tpu_custom_call.1} parent=1 // pred_check
      _
    $region15: #{tpu_custom_call.1} parent=1 // pred_check_branch
      %19 = sbr.rel (0) target = $region17
    $region16: #{tpu_custom_call.1} parent=1 // pred_region
      _
    $region17: #{tpu_custom_call.1} parent=1 // pred_fallthru
      _
    // Predicated region
    $region18: #{tpu_custom_call.1} parent=1 // pred_check
      _
    $region19: #{tpu_custom_call.1} parent=1 // pred_check_branch
      %21 = sbr.rel (0) target = $region21
    $region20: #{tpu_custom_call.1} parent=1 // pred_region
      _
    $region21: #{tpu_custom_call.1} parent=1 // pred_fallthru
      _
    // Predicated region
    $region22: #{tpu_custom_call.1} parent=1 // pred_check
      _
    $region23: #{tpu_custom_call.1} parent=1 // pred_check_branch
      %23 = sbr.rel (0) target = $region25
    $region24: #{tpu_custom_call.1} parent=1 // pred_region
      _
    $region25: #{tpu_custom_call.1} parent=1 // pred_fallthru
      _
    %v25 = vld [vmem:[%s0] sm:$0xf]
    %v26 = vld [vmem:[%s0 + $0x4] sm:$0xf]
    %v27 = vld [vmem:[%s0 + $0x8] sm:$0xf]
    %v28 = vld [vmem:[%s0 + $0xc] sm:$0xf]
    %v29 = vld [vmem:[%s0 + $0x10] sm:$0xf]
    %v30 = vld [vmem:[%s0 + $0x14] sm:$0xf]
    %v31 = vld [vmem:[%s0 + $0x18] sm:$0xf]
    %v32 = vld [vmem:[%s0 + $0x1c] sm:$0xf]
    %v33 = vld [vmem:[%s0 + $0x20] sm:$0xf]
    %v34 = vld [vmem:[%s0 + $0x24] sm:$0xf]
    %v35 = vld [vmem:[%s0 + $0x28] sm:$0xf]
    %v36 = vld [vmem:[%s0 + $0x2c] sm:$0xf]
    %v37 = vld [vmem:[%s0 + $0x30] sm:$0xf]
    %v38 = vld [vmem:[%s0 + $0x34] sm:$0xf]
    %v39 = vld [vmem:[%s0 + $0x38] sm:$0xf]
    %v40 = vld [vmem:[%s0 + $0x3c] sm:$0xf]
    %v41 = vld [vmem:[%s2] sm:$0xf]
    %v42 = vld [vmem:[%s2 + $0x4] sm:$0xf]
    %v43 = vld [vmem:[%s2 + $0x8] sm:$0xf]
    %v44 = vld [vmem:[%s1] sm:$0xf]
    %v45 = vld [vmem:[%s1 + $0x4] sm:$0xf]
    %v46 = vld [vmem:[%s1 + $0x8] sm:$0xf]
    %v47 = vld [vmem:[%s1 + $0xc] sm:$0xf]
    %v48 = vld [vmem:[%s1 + $0x10] sm:$0xf]
    %v49 = vld [vmem:[%s1 + $0x14] sm:$0xf]
    %v50 = vld [vmem:[%s1 + $0x18] sm:$0xf]
    %v51 = vld [vmem:[%s1 + $0x1c] sm:$0xf]
    %v52 = vld [vmem:[%s1 + $0x20] sm:$0xf]
    %v53 = vld [vmem:[%s1 + $0x24] sm:$0xf]
    %v54 = vld [vmem:[%s1 + $0x28] sm:$0xf]
    %v55 = vld [vmem:[%s1 + $0x2c] sm:$0xf]
    %v56 = vld [vmem:[%s1 + $0x30] sm:$0xf]
    %v57 = vld [vmem:[%s1 + $0x34] sm:$0xf]
    %v58 = vld [vmem:[%s1 + $0x38] sm:$0xf]
    %v59 = vld [vmem:[%s1 + $0x3c] sm:$0xf]
    %v60 = vld [vmem:[%s3] sm:$0xf]
    %v61 = vld [vmem:[%s3 + $0x4] sm:$0xf]
    %v62 = vld [vmem:[%s3 + $0x8] sm:$0xf]
    %v63 = vld [vmem:[%s3 + $0xc] sm:$0xf]
    %v80 = vunpack.c.l.b16 %v44
    %v81 = vunpack.c.l.b16 %v45
    %v82 = vunpack.c.l.b16 %v46
    %v83 = vunpack.c.l.b16 %v47
    %v84 = vunpack.c.l.b16 %v48
    %v85 = vunpack.c.l.b16 %v49
    %v86 = vunpack.c.l.b16 %v50
    %v87 = vunpack.c.l.b16 %v51
    %v88 = vunpack.c.l.b16 %v52
    %v89 = vunpack.c.l.b16 %v53
    %v90 = vunpack.c.l.b16 %v54
    %v91 = vunpack.c.l.b16 %v55
    %v92 = vunpack.c.l.b16 %v56
    %v93 = vunpack.c.l.b16 %v57
    %v94 = vunpack.c.l.b16 %v58
    %v95 = vunpack.c.l.b16 %v59
    %v96 = vpack.c.b16 %v81, %v80
    %v97 = vpack.c.b16 %v83, %v82
    %v98 = vpack.c.b16 %v85, %v84
    %v99 = vpack.c.b16 %v87, %v86
    %v100 = vpack.c.b16 %v89, %v88
    %v101 = vpack.c.b16 %v91, %v90
    %v102 = vpack.c.b16 %v93, %v92
    %v103 = vpack.c.b16 %v95, %v94
    %v108 = vunpack.c.l.b16 %v60
    %v109 = vunpack.c.l.b16 %v61
    %v110 = vunpack.c.l.b16 %v62
    %v111 = vunpack.c.l.b16 %v63
    %v112 = vpack.c.b16 %v109, %v108
    %v113 = vpack.c.b16 %v111, %v110
    %vm116 = vcmask 261120
    %v118 = vsel %vm116, %v96, 0
    %v121 = vsel %vm116, %v97, 0
    %v124 = vsel %vm116, %v98, 0
    %v127 = vsel %vm116, %v99, 0
    %v130 = vsel %vm116, %v100, 0
    %v133 = vsel %vm116, %v101, 0
    %v136 = vsel %vm116, %v102, 0
    %v139 = vsel %vm116, %v103, 0
    %141 = vmatpush.bf16.msra.mxu0 0
    %142 = vmatpush.bf16.msra.mxu0 0
    %143 = vmatpush.bf16.msra.mxu0 0
    %144 = vmatpush.bf16.msra.mxu0 0
    %145 = vmatpush.bf16.msra.mxu0 0
    %146 = vmatpush.bf16.msra.mxu0 0
    %147 = vmatpush.bf16.msra.mxu0 %v113
    %148 = vmatpush.bf16.msra.mxu0 %v112
    %149 = vmatmul.bf16.gmra.mxu0 %v118
    %v150 = vpop.f32.mrf.mxu0
    %v151 = vadd.f32 0.0, %v150
    %v152 = vpop.f32.mrf.mxu0
    %v153 = vadd.f32 0.0, %v152
    %154 = vmatmul.bf16.gmra.mxu0 %v121
    %v155 = vpop.f32.mrf.mxu0
    %v156 = vadd.f32 0.0, %v155
    %v157 = vpop.f32.mrf.mxu0
    %v158 = vadd.f32 0.0, %v157
    %159 = vmatmul.bf16.gmra.mxu0 %v124
    %v160 = vpop.f32.mrf.mxu0
    %v161 = vadd.f32 0.0, %v160
    %v162 = vpop.f32.mrf.mxu0
    %v163 = vadd.f32 0.0, %v162
    %164 = vmatmul.bf16.gmra.mxu0 %v127
    %v165 = vpop.f32.mrf.mxu0
    %v166 = vadd.f32 0.0, %v165
    %v167 = vpop.f32.mrf.mxu0
    %v168 = vadd.f32 0.0, %v167
    %169 = vmatmul.bf16.gmra.mxu0 %v130
    %v170 = vpop.f32.mrf.mxu0
    %v171 = vadd.f32 0.0, %v170
    %v172 = vpop.f32.mrf.mxu0
    %v173 = vadd.f32 0.0, %v172
    %174 = vmatmul.bf16.gmra.mxu0 %v133
    %v175 = vpop.f32.mrf.mxu0
    %v176 = vadd.f32 0.0, %v175
    %v177 = vpop.f32.mrf.mxu0
    %v178 = vadd.f32 0.0, %v177
    %179 = vmatmul.bf16.gmra.mxu0 %v136
    %v180 = vpop.f32.mrf.mxu0
    %v181 = vadd.f32 0.0, %v180
    %v182 = vpop.f32.mrf.mxu0
    %v183 = vadd.f32 0.0, %v182
    %184 = vmatmul.bf16.gmra.mxu0 %v139
    %v185 = vpop.f32.mrf.mxu0
    %v186 = vadd.f32 0.0, %v185
    %v187 = vpop.f32.mrf.mxu0
    %v188 = vadd.f32 0.0, %v187
    %189 = vdwg.mxu0
    %v206 = vunpack.c.l.b16 %v25
    %v207 = vunpack.c.l.b16 %v26
    %v208 = vunpack.c.l.b16 %v27
    %v209 = vunpack.c.l.b16 %v28
    %v210 = vunpack.c.l.b16 %v29
    %v211 = vunpack.c.l.b16 %v30
    %v212 = vunpack.c.l.b16 %v31
    %v213 = vunpack.c.l.b16 %v32
    %v214 = vunpack.c.l.b16 %v33
    %v215 = vunpack.c.l.b16 %v34
    %v216 = vunpack.c.l.b16 %v35
    %v217 = vunpack.c.l.b16 %v36
    %v218 = vunpack.c.l.b16 %v37
    %v219 = vunpack.c.l.b16 %v38
    %v220 = vunpack.c.l.b16 %v39
    %v221 = vunpack.c.l.b16 %v40
    %v222 = vpack.c.b16 %v207, %v206
    %v223 = vpack.c.b16 %v209, %v208
    %v224 = vpack.c.b16 %v211, %v210
    %v225 = vpack.c.b16 %v213, %v212
    %v226 = vpack.c.b16 %v215, %v214
    %v227 = vpack.c.b16 %v217, %v216
    %v228 = vpack.c.b16 %v219, %v218
    %v229 = vpack.c.b16 %v221, %v220
    %v233 = vunpack.c.l.b16 %v41
    %v234 = vunpack.c.l.b16 %v42
    %v235 = vunpack.c.l.b16 %v43
    %v236 = vpack.c.b16 %v234, %v233
    %v237 = vpack.c.b16 %v235, %v235
    %vm239 = vcmask 195584
    %v241 = vsel %vm239, %v222, 0
    %v244 = vsel %vm239, %v223, 0
    %v247 = vsel %vm239, %v224, 0
    %v250 = vsel %vm239, %v225, 0
    %v253 = vsel %vm239, %v226, 0
    %v256 = vsel %vm239, %v227, 0
    %v259 = vsel %vm239, %v228, 0
    %v262 = vsel %vm239, %v229, 0
    %vm264 = vcmask 1043456
    %v266 = vsel %vm264, %v237, 0
    %268 = vmatpush.bf16.msra.mxu0 0
    %269 = vmatpush.bf16.msra.mxu0 0
    %270 = vmatpush.bf16.msra.mxu0 0
    %271 = vmatpush.bf16.msra.mxu0 0
    %272 = vmatpush.bf16.msra.mxu0 0
    %273 = vmatpush.bf16.msra.mxu0 0
    %274 = vmatpush.bf16.msra.mxu0 %v266
    %275 = vmatpush.bf16.msra.mxu0 %v236
    %276 = vmatmul.bf16.gmra.mxu0 %v241
    %v277 = vpop.f32.mrf.mxu0
    %v278 = vadd.f32 %v151, %v277
    %v279 = vpop.f32.mrf.mxu0
    %v280 = vadd.f32 %v153, %v279
    %281 = vmatmul.bf16.gmra.mxu0 %v244
    %v282 = vpop.f32.mrf.mxu0
    %v283 = vadd.f32 %v156, %v282
    %v284 = vpop.f32.mrf.mxu0
    %v285 = vadd.f32 %v158, %v284
    %286 = vmatmul.bf16.gmra.mxu0 %v247
    %v287 = vpop.f32.mrf.mxu0
    %v288 = vadd.f32 %v161, %v287
    %v289 = vpop.f32.mrf.mxu0
    %v290 = vadd.f32 %v163, %v289
    %291 = vmatmul.bf16.gmra.mxu0 %v250
    %v292 = vpop.f32.mrf.mxu0
    %v293 = vadd.f32 %v166, %v292
    %v294 = vpop.f32.mrf.mxu0
    %v295 = vadd.f32 %v168, %v294
    %296 = vmatmul.bf16.gmra.mxu0 %v253
    %v297 = vpop.f32.mrf.mxu0
    %v298 = vadd.f32 %v171, %v297
    %v299 = vpop.f32.mrf.mxu0
    %v300 = vadd.f32 %v173, %v299
    %301 = vmatmul.bf16.gmra.mxu0 %v256
    %v302 = vpop.f32.mrf.mxu0
    %v303 = vadd.f32 %v176, %v302
    %v304 = vpop.f32.mrf.mxu0
    %v305 = vadd.f32 %v178, %v304
    %306 = vmatmul.bf16.gmra.mxu0 %v259
    %v307 = vpop.f32.mrf.mxu0
    %v308 = vadd.f32 %v181, %v307
    %v309 = vpop.f32.mrf.mxu0
    %v310 = vadd.f32 %v183, %v309
    %311 = vmatmul.bf16.gmra.mxu0 %v262
    %v312 = vpop.f32.mrf.mxu0
    %v313 = vadd.f32 %v186, %v312
    %v314 = vpop.f32.mrf.mxu0
    %v315 = vadd.f32 %v188, %v314
    %316 = vdwg.mxu0
    %v317 = vld [vmem:[%s5] sm:$0x1]
    %v319 = vperm.slane %v317, 0
    %v321 = vadd.f32 %v278, %v319
    %v322 = vadd.f32 %v280, %v319
    %v323 = vadd.f32 %v283, %v319
    %v324 = vadd.f32 %v285, %v319
    %v325 = vadd.f32 %v288, %v319
    %v326 = vadd.f32 %v290, %v319
    %v327 = vadd.f32 %v293, %v319
    %v328 = vadd.f32 %v295, %v319
    %v329 = vadd.f32 %v298, %v319
    %v330 = vadd.f32 %v300, %v319
    %v331 = vadd.f32 %v303, %v319
    %v332 = vadd.f32 %v305, %v319
    %v333 = vadd.f32 %v308, %v319
    %v334 = vadd.f32 %v310, %v319
    %v335 = vadd.f32 %v313, %v319
    %v336 = vadd.f32 %v315, %v319
    %v337 = vpack.c.bf16 %v322, %v321
    %v338 = vpack.c.bf16 %v324, %v323
    %v339 = vpack.c.bf16 %v326, %v325
    %v340 = vpack.c.bf16 %v328, %v327
    %v341 = vpack.c.bf16 %v330, %v329
    %v342 = vpack.c.bf16 %v332, %v331
    %v343 = vpack.c.bf16 %v334, %v333
    %v344 = vpack.c.bf16 %v336, %v335
    %v345 = vld [vmem:[%s4] sm:$0xf]
    %v346 = vld [vmem:[%s4 + $0x4] sm:$0xf]
    %v347 = vld [vmem:[%s4 + $0x8] sm:$0xf]
    %v348 = vld [vmem:[%s4 + $0xc] sm:$0xf]
    %s349 = scalar_lea.vmem %s5, 1
    %v350 = vld [vmem:[%s349] sm:$0x1]
    %v352 = vperm.slane %v350, 0
    %v358 = vunpack.c.l.b16 %v345
    %v359 = vunpack.c.l.b16 %v346
    %v360 = vunpack.c.l.b16 %v347
    %v361 = vunpack.c.l.b16 %v348
    %v362 = vpack.c.b16 %v359, %v358
    %v363 = vpack.c.b16 %v361, %v360
    %v367 = vsel %vm116, %v337, 0
    %v370 = vsel %vm116, %v338, 0
    %v373 = vsel %vm116, %v339, 0
    %v376 = vsel %vm116, %v340, 0
    %v379 = vsel %vm116, %v341, 0
    %v382 = vsel %vm116, %v342, 0
    %v385 = vsel %vm116, %v343, 0
    %v388 = vsel %vm116, %v344, 0
    %390 = vmatpush.bf16.msra.mxu0 0
    %391 = vmatpush.bf16.msra.mxu0 0
    %392 = vmatpush.bf16.msra.mxu0 0
    %393 = vmatpush.bf16.msra.mxu0 0
    %394 = vmatpush.bf16.msra.mxu0 0
    %395 = vmatpush.bf16.msra.mxu0 0
    %396 = vmatpush.bf16.msra.mxu0 %v363
    %397 = vmatpush.bf16.msra.mxu0 %v362
    %398 = vmatmul.bf16.gmra.mxu0 %v367
    %v399 = vpop.f32.mrf.mxu0
    %v400 = vadd.f32 %v352, %v399
    %v401 = vpop.f32.mrf.mxu0
    %v402 = vadd.f32 %v352, %v401
    %403 = vmatmul.bf16.gmra.mxu0 %v370
    %v404 = vpop.f32.mrf.mxu0
    %v405 = vadd.f32 %v352, %v404
    %v406 = vpop.f32.mrf.mxu0
    %v407 = vadd.f32 %v352, %v406
    %408 = vmatmul.bf16.gmra.mxu0 %v373
    %v409 = vpop.f32.mrf.mxu0
    %v410 = vadd.f32 %v352, %v409
    %v411 = vpop.f32.mrf.mxu0
    %v412 = vadd.f32 %v352, %v411
    %413 = vmatmul.bf16.gmra.mxu0 %v376
    %v414 = vpop.f32.mrf.mxu0
    %v415 = vadd.f32 %v352, %v414
    %v416 = vpop.f32.mrf.mxu0
    %v417 = vadd.f32 %v352, %v416
    %418 = vmatmul.bf16.gmra.mxu0 %v379
    %v419 = vpop.f32.mrf.mxu0
    %v420 = vadd.f32 %v352, %v419
    %v421 = vpop.f32.mrf.mxu0
    %v422 = vadd.f32 %v352, %v421
    %423 = vmatmul.bf16.gmra.mxu0 %v382
    %v424 = vpop.f32.mrf.mxu0
    %v425 = vadd.f32 %v352, %v424
    %v426 = vpop.f32.mrf.mxu0
    %v427 = vadd.f32 %v352, %v426
    %428 = vmatmul.bf16.gmra.mxu0 %v385
    %v429 = vpop.f32.mrf.mxu0
    %v430 = vadd.f32 %v352, %v429
    %v431 = vpop.f32.mrf.mxu0
    %v432 = vadd.f32 %v352, %v431
    %433 = vmatmul.bf16.gmra.mxu0 %v388
    %v434 = vpop.f32.mrf.mxu0
    %v435 = vadd.f32 %v352, %v434
    %v436 = vpop.f32.mrf.mxu0
    %v437 = vadd.f32 %v352, %v436
    %438 = vdwg.mxu0
    %v439 = vmax.f32 %v400, 0.0
    %v440 = vmax.f32 %v402, 0.0
    %v441 = vmax.f32 %v405, 0.0
    %v442 = vmax.f32 %v407, 0.0
    %v443 = vmax.f32 %v410, 0.0
    %v444 = vmax.f32 %v412, 0.0
    %v445 = vmax.f32 %v415, 0.0
    %v446 = vmax.f32 %v417, 0.0
    %v447 = vmax.f32 %v420, 0.0
    %v448 = vmax.f32 %v422, 0.0
    %v449 = vmax.f32 %v425, 0.0
    %v450 = vmax.f32 %v427, 0.0
    %v451 = vmax.f32 %v430, 0.0
    %v452 = vmax.f32 %v432, 0.0
    %v453 = vmax.f32 %v435, 0.0
    %v454 = vmax.f32 %v437, 0.0
    %v455 = vpack.c.bf16 %v440, %v439
    %v456 = vpack.c.bf16 %v442, %v441
    %v457 = vpack.c.bf16 %v444, %v443
    %v458 = vpack.c.bf16 %v446, %v445
    %v459 = vpack.c.bf16 %v448, %v447
    %v460 = vpack.c.bf16 %v450, %v449
    %v461 = vpack.c.bf16 %v452, %v451
    %v462 = vpack.c.bf16 %v454, %v453
    %s463 = scalar_lea.vmem %s4, 16
    %v464 = vld [vmem:[%s463] sm:$0xf]
    %v465 = vld [vmem:[%s463 + $0x4] sm:$0xf]
    %v466 = vld [vmem:[%s463 + $0x8] sm:$0xf]
    %v467 = vld [vmem:[%s463 + $0xc] sm:$0xf]
    %s468 = scalar_lea.vmem %s5, 2
    %v469 = vld [vmem:[%s468] sm:$0x1]
    %v471 = vperm.slane %v469, 0
    %v477 = vunpack.c.l.b16 %v464
    %v478 = vunpack.c.l.b16 %v465
    %v479 = vunpack.c.l.b16 %v466
    %v480 = vunpack.c.l.b16 %v467
    %v481 = vpack.c.b16 %v478, %v477
    %v482 = vpack.c.b16 %v480, %v479
    %v486 = vsel %vm116, %v455, 0
    %v489 = vsel %vm116, %v456, 0
    %v492 = vsel %vm116, %v457, 0
    %v495 = vsel %vm116, %v458, 0
    %v498 = vsel %vm116, %v459, 0
    %v501 = vsel %vm116, %v460, 0
    %v504 = vsel %vm116, %v461, 0
    %v507 = vsel %vm116, %v462, 0
    %509 = vmatpush.bf16.msra.mxu0 0
    %510 = vmatpush.bf16.msra.mxu0 0
    %511 = vmatpush.bf16.msra.mxu0 0
    %512 = vmatpush.bf16.msra.mxu0 0
    %513 = vmatpush.bf16.msra.mxu0 0
    %514 = vmatpush.bf16.msra.mxu0 0
    %515 = vmatpush.bf16.msra.mxu0 %v482
    %516 = vmatpush.bf16.msra.mxu0 %v481
    %517 = vmatmul.bf16.gmra.mxu0 %v486
    %v518 = vpop.f32.mrf.mxu0
    %v519 = vadd.f32 %v471, %v518
    %v520 = vpop.f32.mrf.mxu0
    %v521 = vadd.f32 %v471, %v520
    %522 = vmatmul.bf16.gmra.mxu0 %v489
    %v523 = vpop.f32.mrf.mxu0
    %v524 = vadd.f32 %v471, %v523
    %v525 = vpop.f32.mrf.mxu0
    %v526 = vadd.f32 %v471, %v525
    %527 = vmatmul.bf16.gmra.mxu0 %v492
    %v528 = vpop.f32.mrf.mxu0
    %v529 = vadd.f32 %v471, %v528
    %v530 = vpop.f32.mrf.mxu0
    %v531 = vadd.f32 %v471, %v530
    %532 = vmatmul.bf16.gmra.mxu0 %v495
    %v533 = vpop.f32.mrf.mxu0
    %v534 = vadd.f32 %v471, %v533
    %v535 = vpop.f32.mrf.mxu0
    %v536 = vadd.f32 %v471, %v535
    %537 = vmatmul.bf16.gmra.mxu0 %v498
    %v538 = vpop.f32.mrf.mxu0
    %v539 = vadd.f32 %v471, %v538
    %v540 = vpop.f32.mrf.mxu0
    %v541 = vadd.f32 %v471, %v540
    %542 = vmatmul.bf16.gmra.mxu0 %v501
    %v543 = vpop.f32.mrf.mxu0
    %v544 = vadd.f32 %v471, %v543
    %v545 = vpop.f32.mrf.mxu0
    %v546 = vadd.f32 %v471, %v545
    %547 = vmatmul.bf16.gmra.mxu0 %v504
    %v548 = vpop.f32.mrf.mxu0
    %v549 = vadd.f32 %v471, %v548
    %v550 = vpop.f32.mrf.mxu0
    %v551 = vadd.f32 %v471, %v550
    %552 = vmatmul.bf16.gmra.mxu0 %v507
    %v553 = vpop.f32.mrf.mxu0
    %v554 = vadd.f32 %v471, %v553
    %v555 = vpop.f32.mrf.mxu0
    %v556 = vadd.f32 %v471, %v555
    %557 = vdwg.mxu0
    %v558 = vmax.f32 %v519, 0.0
    %v559 = vmax.f32 %v521, 0.0
    %v560 = vmax.f32 %v524, 0.0
    %v561 = vmax.f32 %v526, 0.0
    %v562 = vmax.f32 %v529, 0.0
    %v563 = vmax.f32 %v531, 0.0
    %v564 = vmax.f32 %v534, 0.0
    %v565 = vmax.f32 %v536, 0.0
    %v566 = vmax.f32 %v539, 0.0
    %v567 = vmax.f32 %v541, 0.0
    %v568 = vmax.f32 %v544, 0.0
    %v569 = vmax.f32 %v546, 0.0
    %v570 = vmax.f32 %v549, 0.0
    %v571 = vmax.f32 %v551, 0.0
    %v572 = vmax.f32 %v554, 0.0
    %v573 = vmax.f32 %v556, 0.0
    %v574 = vpack.c.bf16 %v559, %v558
    %v575 = vpack.c.bf16 %v561, %v560
    %v576 = vpack.c.bf16 %v563, %v562
    %v577 = vpack.c.bf16 %v565, %v564
    %v578 = vpack.c.bf16 %v567, %v566
    %v579 = vpack.c.bf16 %v569, %v568
    %v580 = vpack.c.bf16 %v571, %v570
    %v581 = vpack.c.bf16 %v573, %v572
    %s582 = scalar_lea.vmem %s4, 32
    %v583 = vld [vmem:[%s582] sm:$0xf]
    %v584 = vld [vmem:[%s582 + $0x4] sm:$0xf]
    %v585 = vld [vmem:[%s582 + $0x8] sm:$0xf]
    %v586 = vld [vmem:[%s582 + $0xc] sm:$0xf]
    %s587 = scalar_lea.vmem %s5, 3
    %v588 = vld [vmem:[%s587] sm:$0x1]
    %v590 = vperm.slane %v588, 0
    %v596 = vunpack.c.l.b16 %v583
    %v597 = vunpack.c.l.b16 %v584
    %v598 = vunpack.c.l.b16 %v585
    %v599 = vunpack.c.l.b16 %v586
    %v600 = vpack.c.b16 %v597, %v596
    %v601 = vpack.c.b16 %v599, %v598
    %v605 = vsel %vm116, %v574, 0
    %v608 = vsel %vm116, %v575, 0
    %v611 = vsel %vm116, %v576, 0
    %v614 = vsel %vm116, %v577, 0
    %v617 = vsel %vm116, %v578, 0
    %v620 = vsel %vm116, %v579, 0
    %v623 = vsel %vm116, %v580, 0
    %v626 = vsel %vm116, %v581, 0
    %628 = vmatpush.bf16.msra.mxu0 0
    %629 = vmatpush.bf16.msra.mxu0 0
    %630 = vmatpush.bf16.msra.mxu0 0
    %631 = vmatpush.bf16.msra.mxu0 0
    %632 = vmatpush.bf16.msra.mxu0 0
    %633 = vmatpush.bf16.msra.mxu0 0
    %634 = vmatpush.bf16.msra.mxu0 %v601
    %635 = vmatpush.bf16.msra.mxu0 %v600
    %636 = vmatmul.bf16.gmra.mxu0 %v605
    %v637 = vpop.f32.mrf.mxu0
    %v638 = vadd.f32 %v590, %v637
    %v639 = vpop.f32.mrf.mxu0
    %v640 = vadd.f32 %v590, %v639
    %641 = vmatmul.bf16.gmra.mxu0 %v608
    %v642 = vpop.f32.mrf.mxu0
    %v643 = vadd.f32 %v590, %v642
    %v644 = vpop.f32.mrf.mxu0
    %v645 = vadd.f32 %v590, %v644
    %646 = vmatmul.bf16.gmra.mxu0 %v611
    %v647 = vpop.f32.mrf.mxu0
    %v648 = vadd.f32 %v590, %v647
    %v649 = vpop.f32.mrf.mxu0
    %v650 = vadd.f32 %v590, %v649
    %651 = vmatmul.bf16.gmra.mxu0 %v614
    %v652 = vpop.f32.mrf.mxu0
    %v653 = vadd.f32 %v590, %v652
    %v654 = vpop.f32.mrf.mxu0
    %v655 = vadd.f32 %v590, %v654
    %656 = vmatmul.bf16.gmra.mxu0 %v617
    %v657 = vpop.f32.mrf.mxu0
    %v658 = vadd.f32 %v590, %v657
    %v659 = vpop.f32.mrf.mxu0
    %v660 = vadd.f32 %v590, %v659
    %661 = vmatmul.bf16.gmra.mxu0 %v620
    %v662 = vpop.f32.mrf.mxu0
    %v663 = vadd.f32 %v590, %v662
    %v664 = vpop.f32.mrf.mxu0
    %v665 = vadd.f32 %v590, %v664
    %666 = vmatmul.bf16.gmra.mxu0 %v623
    %v667 = vpop.f32.mrf.mxu0
    %v668 = vadd.f32 %v590, %v667
    %v669 = vpop.f32.mrf.mxu0
    %v670 = vadd.f32 %v590, %v669
    %671 = vmatmul.bf16.gmra.mxu0 %v626
    %v672 = vpop.f32.mrf.mxu0
    %v673 = vadd.f32 %v590, %v672
    %v674 = vpop.f32.mrf.mxu0
    %v675 = vadd.f32 %v590, %v674
    %676 = vdwg.mxu0
    %v677 = vmax.f32 %v638, 0.0
    %v678 = vmax.f32 %v640, 0.0
    %v679 = vmax.f32 %v643, 0.0
    %v680 = vmax.f32 %v645, 0.0
    %v681 = vmax.f32 %v648, 0.0
    %v682 = vmax.f32 %v650, 0.0
    %v683 = vmax.f32 %v653, 0.0
    %v684 = vmax.f32 %v655, 0.0
    %v685 = vmax.f32 %v658, 0.0
    %v686 = vmax.f32 %v660, 0.0
    %v687 = vmax.f32 %v663, 0.0
    %v688 = vmax.f32 %v665, 0.0
    %v689 = vmax.f32 %v668, 0.0
    %v690 = vmax.f32 %v670, 0.0
    %v691 = vmax.f32 %v673, 0.0
    %v692 = vmax.f32 %v675, 0.0
    %s693 = scalar_lea.vmem %s5, 4
    %v694 = vld [vmem:[%s693] sm:$0x1]
    %s695 = scalar_lea.vmem %s5, 5
    %v696 = vld [vmem:[%s695] sm:$0x1]
    %698 = vset.pattern.permute.xlu0 0
    %699 = vperm.xlu0 %698, %v696
    %v700 = vpop.permute.xlu0 %699
    %v702 = vperm.slane %v700, 0
    %v704 = vsel %vm116, %v694, 0
    %v707 = vsel %vm116, %v677, 0
    %v710 = vsel %vm116, %v678, 0
    %v713 = vsel %vm116, %v679, 0
    %v716 = vsel %vm116, %v680, 0
    %v719 = vsel %vm116, %v681, 0
    %v722 = vsel %vm116, %v682, 0
    %v725 = vsel %vm116, %v683, 0
    %v728 = vsel %vm116, %v684, 0
    %v731 = vsel %vm116, %v685, 0
    %v734 = vsel %vm116, %v686, 0
    %v737 = vsel %vm116, %v687, 0
    %v740 = vsel %vm116, %v688, 0
    %v743 = vsel %vm116, %v689, 0
    %v746 = vsel %vm116, %v690, 0
    %v749 = vsel %vm116, %v691, 0
    %v752 = vsel %vm116, %v692, 0
    %754 = vmatpush.xpose.msra.mxu0 %v752
    %755 = vmatpush.xpose.msra.mxu0 %v749
    %756 = vmatpush.xpose.msra.mxu0 %v746
    %757 = vmatpush.xpose.msra.mxu0 %v743
    %758 = vmatpush.xpose.msra.mxu0 %v740
    %759 = vmatpush.xpose.msra.mxu0 %v737
    %760 = vmatpush.xpose.msra.mxu0 %v734
    %761 = vmatpush.xpose.msra.mxu0 %v731
    %762 = vmatpush.xpose.msra.mxu0 %v728
    %763 = vmatpush.xpose.msra.mxu0 %v725
    %764 = vmatpush.xpose.msra.mxu0 %v722
    %765 = vmatpush.xpose.msra.mxu0 %v719
    %766 = vmatpush.xpose.msra.mxu0 %v716
    %767 = vmatpush.xpose.msra.mxu0 %v713
    %768 = vmatpush.xpose.msra.mxu0 %v710
    %769 = vmatpush.xpose.msra.mxu0 %v707
    %770 = vmatmul.f32.gmra.mxu0 %v704
    %v771 = vpop.f32.mrf.mxu0
    %v772 = vadd.f32 %v702, %v771
    %773 = vdwg.mxu0
    %774 = vst [vmem:[#allocation2] sm:$0x1] %v772
    // Predicated region
    $region26: #{tpu_custom_call.1} parent=1 // pred_check
      _
    $region27: #{tpu_custom_call.1} parent=1 // pred_check_branch
      %776 = sbr.rel (0) target = $region29
    $region28: #{tpu_custom_call.1} parent=1 // pred_region
      %778 = vsyncadd [#allocation3], 0
      %s780 = sshll.u32 [#allocation2], 4
      %s781 = int_to_ptr.vmem [resolvable:$true] %s780
      %s782 = sshll.u32 %s6, 4
      %s783 = int_to_ptr.hbm [resolvable:$true] %s782
      %785 = dma.vmem_to_hbm [thread:$0]  %s781, 16, %s783, [#allocation3]
    $region29: #{tpu_custom_call.1} parent=1 // pred_fallthru
      _
    // Predicated region
    $region30: #{tpu_custom_call.1} parent=1 // pred_check
      _
    $region31: #{tpu_custom_call.1} parent=1 // pred_check_branch
      %787 = sbr.rel (0) target = $region33
    $region32: #{tpu_custom_call.1} parent=1 // pred_region
      %789 = dma.done [#allocation3], 16
    $region33: #{tpu_custom_call.1} parent=1 // pred_fallthru
      _
    %790 = vsyncpa [#allocation3], 1

</llo_original>
